<compile_context>
chip_gen: v5e
topology: v5e:2x2
jax: 0.10.0
libtpu: 0.0.40
codegen_flags: <defaults>
</compile_context>

<pallas_src>
import functools

import numpy as np

import jax
import jax.numpy as jnp
from jax import lax
from jax.experimental import pallas as pl
from jax.experimental.pallas import tpu as pltpu


def _upsample_phase_kernel(x_ref, w_ref, o_ref, *, n_phase, neg_slope):
    """One batch element per grid step.

    x_ref : (Kpad, Q)             VMEM — offset-expanded input rows (+ ones row)
    w_ref : (n_phase, Cout, Kpad) VMEM — per-phase weight slabs (bias folded in)
    o_ref : (n_phase, Cout, Q)    VMEM — per-phase output slabs
    """
    x = x_ref[...]                                            # (Kpad, Q), f32

    def body(ph, carry):
        # (Cout, Kpad) @ (Kpad, Q) -> (Cout, Q); f32 accumulate.
        acc = jnp.dot(w_ref[ph], x, preferred_element_type=jnp.float32)
        y = jnp.where(acc >= 0, acc, neg_slope * acc)          # LeakyReLU
        o_ref[ph] = y.astype(o_ref.dtype)
        return carry

    lax.fori_loop(0, n_phase, body, 0, unroll=True)


@functools.partial(jax.jit,
                   static_argnames=("stride", "padding", "negative_slope"))
def upsample_forward(x, weight, bias, *, stride, padding, negative_slope=0.01):
    """x: (N, Cin, D, H, W); weight: (Cin, Cout, kD, kH, kW); bias: (Cout,)."""
    n, cin, d, h, w_sp = x.shape
    wcin, cout, kD, kH, kW = weight.shape
    assert wcin == cin
    s, p = int(stride), int(padding)

    od = (d - 1) * s - 2 * p + kD
    oh = (h - 1) * s - 2 * p + kH
    ow = (w_sp - 1) * s - 2 * p + kW
    qd, qh, qw = -(-od // s), -(-oh // s), -(-ow // s)          # ceil(O / s)
    q_total = qd * qh * qw
    n_phase = s * s * s

    # ---- sub-pixel (phase) tap decomposition --------------------------------
    # Output o = s*q + r uses only kernel taps kk with (r + p - kk) % s == 0,
    # reading input i = q + (r + p - kk)//s.
    def phase_taps(kdim):
        taps = []
        for r in range(s):
            lst = [(kk, (r + p - kk) // s) for kk in range(kdim)
                   if (r + p - kk) % s == 0]
            taps.append(lst)
        return taps

    taps_d, taps_h, taps_w = phase_taps(kD), phase_taps(kH), phase_taps(kW)

    offs_d = sorted({dd for lst in taps_d for (_, dd) in lst}) or [0]
    offs_h = sorted({dh for lst in taps_h for (_, dh) in lst}) or [0]
    offs_w = sorted({dw for lst in taps_w for (_, dw) in lst}) or [0]
    off_index = {}
    for dd in offs_d:
        for dh in offs_h:
            for dw in offs_w:
                off_index[(dd, dh, dw)] = len(off_index)
    n_off = len(off_index)

    # ---- minimal zero padding so every shifted read is in range -------------
    def pad_amounts(offs, q, dim):
        lo = max(0, -min(offs))
        hi = max(0, q - 1 + max(offs) - (dim - 1))
        return lo, hi

    plo_d, phi_d = pad_amounts(offs_d, qd, d)
    plo_h, phi_h = pad_amounts(offs_h, qh, h)
    plo_w, phi_w = pad_amounts(offs_w, qw, w_sp)
    x_pad = jnp.pad(x, ((0, 0), (0, 0),
                        (plo_d, phi_d), (plo_h, phi_h), (plo_w, phi_w)))

    # ---- wrapper-side offset expansion: lane-dense rows for every tap -------
    slabs = []
    for (dd, dh, dw) in off_index:          # insertion order == off_index value
        slabs.append(x_pad[:, :,
                           plo_d + dd: plo_d + dd + qd,
                           plo_h + dh: plo_h + dh + qh,
                           plo_w + dw: plo_w + dw + qw])
    x_off = jnp.stack(slabs, axis=1)                 # (N, n_off, Cin, Qd, Qh, Qw)
    x_rows = x_off.reshape(n, n_off * cin, q_total).astype(jnp.float32)

    k_data = n_off * cin
    bias_row = k_data
    kpad = -(-(k_data + 1) // 8) * 8                 # pad K to a multiple of 8
    parts = [x_rows, jnp.ones((n, 1, q_total), jnp.float32)]
    if kpad > k_data + 1:
        parts.append(jnp.zeros((n, kpad - k_data - 1, q_total), jnp.float32))
    x_aug = jnp.concatenate(parts, axis=1)           # (N, Kpad, Q)

    # ---- per-phase weight slabs (bias folded in via the ones row) -----------
    p_list, o_list, kd_list, kh_list, kw_list = [], [], [], [], []
    for rd in range(s):
        for rh in range(s):
            for rw in range(s):
                pidx = (rd * s + rh) * s + rw
                for (kd, dd) in taps_d[rd]:
                    for (kh, dh) in taps_h[rh]:
                        for (kw, dw) in taps_w[rw]:
                            p_list.append(pidx)
                            o_list.append(off_index[(dd, dh, dw)])
                            kd_list.append(kd)
                            kh_list.append(kh)
                            kw_list.append(kw)

    w_all = jnp.zeros((n_phase, cout, kpad), jnp.float32)
    if p_list:
        nt = len(p_list)
        w_taps = weight[:, :, np.asarray(kd_list), np.asarray(kh_list),
                        np.asarray(kw_list)]                  # (Cin, Cout, nt)
        w_taps = jnp.transpose(w_taps, (2, 0, 1)).reshape(nt * cin, cout)
        p_rep = np.repeat(np.asarray(p_list), cin)
        row_rep = (np.repeat(np.asarray(o_list) * cin, cin)
                   + np.tile(np.arange(cin), nt))
        w_all = w_all.at[p_rep, :, row_rep].add(w_taps.astype(jnp.float32))
    w_all = w_all.at[:, :, bias_row].add(bias.astype(jnp.float32)[None, :])

    # ---- Pallas call ---------------------------------------------------------
    kernel = functools.partial(_upsample_phase_kernel,
                               n_phase=n_phase,
                               neg_slope=float(negative_slope))
    phased = pl.pallas_call(
        kernel,
        out_shape=jax.ShapeDtypeStruct((n, n_phase, cout, q_total), x.dtype),
        grid=(n,),
        in_specs=[
            pl.BlockSpec((None, kpad, q_total), lambda i: (i, 0, 0)),
            pl.BlockSpec((n_phase, cout, kpad), lambda i: (0, 0, 0)),
        ],
        out_specs=pl.BlockSpec((None, n_phase, cout, q_total),
                               lambda i: (i, 0, 0, 0)),
        compiler_params=pltpu.CompilerParams(
            dimension_semantics=("parallel",)),
    )(x_aug, w_all)

    # ---- interleave phases (pure data movement in XLA) and crop --------------
    out = phased.reshape(n, s, s, s, cout, qd, qh, qw)
    out = jnp.transpose(out, (0, 4, 5, 1, 6, 2, 7, 3))
    out = out.reshape(n, cout, s * qd, s * qh, s * qw)
    return out[:, :, :od, :oh, :ow]


def reference_upsample(x, weight, bias, stride, padding, negative_slope=0.01):
    """Independent scatter-formulation reference for ConvTranspose3d + LeakyReLU."""
    n, cin, d, h, w_sp = x.shape
    _, cout, kD, kH, kW = weight.shape
    s, p = stride, padding
    big = jnp.zeros((n, cout, (d - 1) * s + kD, (h - 1) * s + kH,
                     (w_sp - 1) * s + kW), jnp.float32)
    for kd in range(kD):
        for kh in range(kH):
            for kw in range(kW):
                contrib = jnp.einsum('ncdhw,co->nodhw', x, weight[:, :, kd, kh, kw])
                big = big.at[:, :,
                             kd:kd + (d - 1) * s + 1:s,
                             kh:kh + (h - 1) * s + 1:s,
                             kw:kw + (w_sp - 1) * s + 1:s].add(contrib)
    y = big[:, :,
            p:big.shape[2] - p,
            p:big.shape[3] - p,
            p:big.shape[4] - p]
    y = y + bias.reshape(1, cout, 1, 1, 1)
    return jnp.where(y >= 0, y, negative_slope * y)


if __name__ == "__main__":
    key = jax.random.PRNGKey(0)
    k1, k2, k3 = jax.random.split(key, 3)

    # Upsample(input_dim=4, output_dim=8, kernel=3, stride=2, padding=1)
    N, Cin, Cout = 2, 4, 8
    D = H = W = 6
    kernel_size, stride, padding = 3, 2, 1

    x = jax.random.normal(k1, (N, Cin, D, H, W), jnp.float32)
    weight = 0.1 * jax.random.normal(
        k2, (Cin, Cout, kernel_size, kernel_size, kernel_size), jnp.float32)
    bias = 0.1 * jax.random.normal(k3, (Cout,), jnp.float32)

    out = upsample_forward(x, weight, bias, stride=stride, padding=padding)
    out = jax.block_until_ready(out)

    expected = (D - 1) * stride - 2 * padding + kernel_size
    assert out.shape == (N, Cout, expected, expected, expected), out.shape

    ref = reference_upsample(x, weight, bias, stride, padding)
    if not bool(jnp.allclose(out, ref, atol=1e-4, rtol=1e-4)):
        raise AssertionError("Pallas kernel output does not match reference")

    print("KERNEL_OK")
</pallas_src>

<mosaic_0001>
module attributes {stable_mosaic.version = 11 : i64} {
  func.func @_upsample_phase_kernel(%arg0: i32, %arg1: memref<1x40x216xf32, #tpu.memory_space<vmem>>, %arg2: memref<8x8x40xf32, #tpu.memory_space<vmem>>, %arg3: memref<1x8x8x216xf32, #tpu.memory_space<vmem>>) attributes {dimension_semantics = [#tpu.dimension_semantics<parallel>], iteration_bounds = array<i64: 2>, scalar_prefetch = 0 : i64, scratch_operands = 0 : i64, tpu.core_type = #tpu.core_type<tc>, window_params = [{transform_indices = @transform_0, window_bounds = array<i64: 1, 40, 216>}, {pipeline_mode = #tpu.pipeline_mode<synchronous>, transform_indices = @transform_1, window_bounds = array<i64: 8, 8, 40>}, {transform_indices = @transform_2, window_bounds = array<i64: 1, 8, 8, 216>}]} {
    %c0 = arith.constant 0 : index
    %c0_0 = arith.constant 0 : index
    %c0_1 = arith.constant 0 : index
    %0 = vector.load %arg1[%c0, %c0_0, %c0_1] : memref<1x40x216xf32, #tpu.memory_space<vmem>>, vector<1x40x216xf32>
    %1 = vector.shape_cast %0 : vector<1x40x216xf32> to vector<40x216xf32>
    %c0_i32 = arith.constant 0 : i32
    %2 = arith.index_cast %c0_i32 : i32 to index
    %c0_2 = arith.constant 0 : index
    %c0_3 = arith.constant 0 : index
    %3 = vector.load %arg2[%2, %c0_2, %c0_3] : memref<8x8x40xf32, #tpu.memory_space<vmem>>, vector<1x8x40xf32>
    %4 = vector.shape_cast %3 : vector<1x8x40xf32> to vector<8x40xf32>
    %cst = arith.constant dense<0.000000e+00> : vector<8x216xf32>
    %5 = tpu.matmul %4, %1, %cst {dimension_numbers = #tpu.dot_dimension_numbers<[1], [0], [0], [1], [0, 0, 1, 1], [], []>} : vector<8x40xf32>, vector<40x216xf32>, vector<8x216xf32> -> vector<8x216xf32>
    %cst_4 = arith.constant 0.000000e+00 : f32
    %6 = vector.broadcast %cst_4 : f32 to vector<8x216xf32>
    %7 = arith.cmpf oge, %5, %6 : vector<8x216xf32>
    %cst_5 = arith.constant 0.00999999977 : f32
    %8 = vector.broadcast %cst_5 : f32 to vector<8x216xf32>
    %9 = arith.mulf %8, %5 : vector<8x216xf32>
    %10 = arith.select %7, %5, %9 : vector<8x216xi1>, vector<8x216xf32>
    %c0_6 = arith.constant 0 : index
    %11 = arith.index_cast %c0_i32 : i32 to index
    %c0_7 = arith.constant 0 : index
    %c0_8 = arith.constant 0 : index
    %12 = vector.load %arg3[%c0_6, %11, %c0_7, %c0_8] : memref<1x8x8x216xf32, #tpu.memory_space<vmem>>, vector<1x1x8x216xf32>
    %13 = vector.shape_cast %12 : vector<1x1x8x216xf32> to vector<8x216xf32>
    %14 = vector.shape_cast %10 : vector<8x216xf32> to vector<1x1x8x216xf32>
    tpu.vector_store %arg3[%c0_6, %11, %c0_7, %c0_8], %14 {strides = array<i32>} : memref<1x8x8x216xf32, #tpu.memory_space<vmem>>, vector<1x1x8x216xf32>,
    %c1_i32 = arith.constant 1 : i32
    %15 = arith.index_cast %c1_i32 : i32 to index
    %c0_9 = arith.constant 0 : index
    %c0_10 = arith.constant 0 : index
    %16 = vector.load %arg2[%15, %c0_9, %c0_10] : memref<8x8x40xf32, #tpu.memory_space<vmem>>, vector<1x8x40xf32>
    %17 = vector.shape_cast %16 : vector<1x8x40xf32> to vector<8x40xf32>
    %cst_11 = arith.constant dense<0.000000e+00> : vector<8x216xf32>
    %18 = tpu.matmul %17, %1, %cst_11 {dimension_numbers = #tpu.dot_dimension_numbers<[1], [0], [0], [1], [0, 0, 1, 1], [], []>} : vector<8x40xf32>, vector<40x216xf32>, vector<8x216xf32> -> vector<8x216xf32>
    %cst_12 = arith.constant 0.000000e+00 : f32
    %19 = vector.broadcast %cst_12 : f32 to vector<8x216xf32>
    %20 = arith.cmpf oge, %18, %19 : vector<8x216xf32>
    %cst_13 = arith.constant 0.00999999977 : f32
    %21 = vector.broadcast %cst_13 : f32 to vector<8x216xf32>
    %22 = arith.mulf %21, %18 : vector<8x216xf32>
    %23 = arith.select %20, %18, %22 : vector<8x216xi1>, vector<8x216xf32>
    %c0_14 = arith.constant 0 : index
    %24 = arith.index_cast %c1_i32 : i32 to index
    %c0_15 = arith.constant 0 : index
    %c0_16 = arith.constant 0 : index
    %25 = vector.load %arg3[%c0_14, %24, %c0_15, %c0_16] : memref<1x8x8x216xf32, #tpu.memory_space<vmem>>, vector<1x1x8x216xf32>
    %26 = vector.shape_cast %25 : vector<1x1x8x216xf32> to vector<8x216xf32>
    %27 = vector.shape_cast %23 : vector<8x216xf32> to vector<1x1x8x216xf32>
    tpu.vector_store %arg3[%c0_14, %24, %c0_15, %c0_16], %27 {strides = array<i32>} : memref<1x8x8x216xf32, #tpu.memory_space<vmem>>, vector<1x1x8x216xf32>,
    %c2_i32 = arith.constant 2 : i32
    %28 = arith.index_cast %c2_i32 : i32 to index
    %c0_17 = arith.constant 0 : index
    %c0_18 = arith.constant 0 : index
    %29 = vector.load %arg2[%28, %c0_17, %c0_18] : memref<8x8x40xf32, #tpu.memory_space<vmem>>, vector<1x8x40xf32>
    %30 = vector.shape_cast %29 : vector<1x8x40xf32> to vector<8x40xf32>
    %cst_19 = arith.constant dense<0.000000e+00> : vector<8x216xf32>
    %31 = tpu.matmul %30, %1, %cst_19 {dimension_numbers = #tpu.dot_dimension_numbers<[1], [0], [0], [1], [0, 0, 1, 1], [], []>} : vector<8x40xf32>, vector<40x216xf32>, vector<8x216xf32> -> vector<8x216xf32>
    %cst_20 = arith.constant 0.000000e+00 : f32
    %32 = vector.broadcast %cst_20 : f32 to vector<8x216xf32>
    %33 = arith.cmpf oge, %31, %32 : vector<8x216xf32>
    %cst_21 = arith.constant 0.00999999977 : f32
    %34 = vector.broadcast %cst_21 : f32 to vector<8x216xf32>
    %35 = arith.mulf %34, %31 : vector<8x216xf32>
    %36 = arith.select %33, %31, %35 : vector<8x216xi1>, vector<8x216xf32>
    %c0_22 = arith.constant 0 : index
    %37 = arith.index_cast %c2_i32 : i32 to index
    %c0_23 = arith.constant 0 : index
    %c0_24 = arith.constant 0 : index
    %38 = vector.load %arg3[%c0_22, %37, %c0_23, %c0_24] : memref<1x8x8x216xf32, #tpu.memory_space<vmem>>, vector<1x1x8x216xf32>
    %39 = vector.shape_cast %38 : vector<1x1x8x216xf32> to vector<8x216xf32>
    %40 = vector.shape_cast %36 : vector<8x216xf32> to vector<1x1x8x216xf32>
    tpu.vector_store %arg3[%c0_22, %37, %c0_23, %c0_24], %40 {strides = array<i32>} : memref<1x8x8x216xf32, #tpu.memory_space<vmem>>, vector<1x1x8x216xf32>,
    %c3_i32 = arith.constant 3 : i32
    %41 = arith.index_cast %c3_i32 : i32 to index
    %c0_25 = arith.constant 0 : index
    %c0_26 = arith.constant 0 : index
    %42 = vector.load %arg2[%41, %c0_25, %c0_26] : memref<8x8x40xf32, #tpu.memory_space<vmem>>, vector<1x8x40xf32>
    %43 = vector.shape_cast %42 : vector<1x8x40xf32> to vector<8x40xf32>
    %cst_27 = arith.constant dense<0.000000e+00> : vector<8x216xf32>
    %44 = tpu.matmul %43, %1, %cst_27 {dimension_numbers = #tpu.dot_dimension_numbers<[1], [0], [0], [1], [0, 0, 1, 1], [], []>} : vector<8x40xf32>, vector<40x216xf32>, vector<8x216xf32> -> vector<8x216xf32>
    %cst_28 = arith.constant 0.000000e+00 : f32
    %45 = vector.broadcast %cst_28 : f32 to vector<8x216xf32>
    %46 = arith.cmpf oge, %44, %45 : vector<8x216xf32>
    %cst_29 = arith.constant 0.00999999977 : f32
    %47 = vector.broadcast %cst_29 : f32 to vector<8x216xf32>
    %48 = arith.mulf %47, %44 : vector<8x216xf32>
    %49 = arith.select %46, %44, %48 : vector<8x216xi1>, vector<8x216xf32>
    %c0_30 = arith.constant 0 : index
    %50 = arith.index_cast %c3_i32 : i32 to index
    %c0_31 = arith.constant 0 : index
    %c0_32 = arith.constant 0 : index
    %51 = vector.load %arg3[%c0_30, %50, %c0_31, %c0_32] : memref<1x8x8x216xf32, #tpu.memory_space<vmem>>, vector<1x1x8x216xf32>
    %52 = vector.shape_cast %51 : vector<1x1x8x216xf32> to vector<8x216xf32>
    %53 = vector.shape_cast %49 : vector<8x216xf32> to vector<1x1x8x216xf32>
    tpu.vector_store %arg3[%c0_30, %50, %c0_31, %c0_32], %53 {strides = array<i32>} : memref<1x8x8x216xf32, #tpu.memory_space<vmem>>, vector<1x1x8x216xf32>,
    %c4_i32 = arith.constant 4 : i32
    %54 = arith.index_cast %c4_i32 : i32 to index
    %c0_33 = arith.constant 0 : index
    %c0_34 = arith.constant 0 : index
    %55 = vector.load %arg2[%54, %c0_33, %c0_34] : memref<8x8x40xf32, #tpu.memory_space<vmem>>, vector<1x8x40xf32>
    %56 = vector.shape_cast %55 : vector<1x8x40xf32> to vector<8x40xf32>
    %cst_35 = arith.constant dense<0.000000e+00> : vector<8x216xf32>
    %57 = tpu.matmul %56, %1, %cst_35 {dimension_numbers = #tpu.dot_dimension_numbers<[1], [0], [0], [1], [0, 0, 1, 1], [], []>} : vector<8x40xf32>, vector<40x216xf32>, vector<8x216xf32> -> vector<8x216xf32>
    %cst_36 = arith.constant 0.000000e+00 : f32
    %58 = vector.broadcast %cst_36 : f32 to vector<8x216xf32>
    %59 = arith.cmpf oge, %57, %58 : vector<8x216xf32>
    %cst_37 = arith.constant 0.00999999977 : f32
    %60 = vector.broadcast %cst_37 : f32 to vector<8x216xf32>
    %61 = arith.mulf %60, %57 : vector<8x216xf32>
    %62 = arith.select %59, %57, %61 : vector<8x216xi1>, vector<8x216xf32>
    %c0_38 = arith.constant 0 : index
    %63 = arith.index_cast %c4_i32 : i32 to index
    %c0_39 = arith.constant 0 : index
    %c0_40 = arith.constant 0 : index
    %64 = vector.load %arg3[%c0_38, %63, %c0_39, %c0_40] : memref<1x8x8x216xf32, #tpu.memory_space<vmem>>, vector<1x1x8x216xf32>
    %65 = vector.shape_cast %64 : vector<1x1x8x216xf32> to vector<8x216xf32>
    %66 = vector.shape_cast %62 : vector<8x216xf32> to vector<1x1x8x216xf32>
    tpu.vector_store %arg3[%c0_38, %63, %c0_39, %c0_40], %66 {strides = array<i32>} : memref<1x8x8x216xf32, #tpu.memory_space<vmem>>, vector<1x1x8x216xf32>,
    %c5_i32 = arith.constant 5 : i32
    %67 = arith.index_cast %c5_i32 : i32 to index
    %c0_41 = arith.constant 0 : index
    %c0_42 = arith.constant 0 : index
    %68 = vector.load %arg2[%67, %c0_41, %c0_42] : memref<8x8x40xf32, #tpu.memory_space<vmem>>, vector<1x8x40xf32>
    %69 = vector.shape_cast %68 : vector<1x8x40xf32> to vector<8x40xf32>
    %cst_43 = arith.constant dense<0.000000e+00> : vector<8x216xf32>
    %70 = tpu.matmul %69, %1, %cst_43 {dimension_numbers = #tpu.dot_dimension_numbers<[1], [0], [0], [1], [0, 0, 1, 1], [], []>} : vector<8x40xf32>, vector<40x216xf32>, vector<8x216xf32> -> vector<8x216xf32>
    %cst_44 = arith.constant 0.000000e+00 : f32
    %71 = vector.broadcast %cst_44 : f32 to vector<8x216xf32>
    %72 = arith.cmpf oge, %70, %71 : vector<8x216xf32>
    %cst_45 = arith.constant 0.00999999977 : f32
    %73 = vector.broadcast %cst_45 : f32 to vector<8x216xf32>
    %74 = arith.mulf %73, %70 : vector<8x216xf32>
    %75 = arith.select %72, %70, %74 : vector<8x216xi1>, vector<8x216xf32>
    %c0_46 = arith.constant 0 : index
    %76 = arith.index_cast %c5_i32 : i32 to index
    %c0_47 = arith.constant 0 : index
    %c0_48 = arith.constant 0 : index
    %77 = vector.load %arg3[%c0_46, %76, %c0_47, %c0_48] : memref<1x8x8x216xf32, #tpu.memory_space<vmem>>, vector<1x1x8x216xf32>
    %78 = vector.shape_cast %77 : vector<1x1x8x216xf32> to vector<8x216xf32>
    %79 = vector.shape_cast %75 : vector<8x216xf32> to vector<1x1x8x216xf32>
    tpu.vector_store %arg3[%c0_46, %76, %c0_47, %c0_48], %79 {strides = array<i32>} : memref<1x8x8x216xf32, #tpu.memory_space<vmem>>, vector<1x1x8x216xf32>,
    %c6_i32 = arith.constant 6 : i32
    %80 = arith.index_cast %c6_i32 : i32 to index
    %c0_49 = arith.constant 0 : index
    %c0_50 = arith.constant 0 : index
    %81 = vector.load %arg2[%80, %c0_49, %c0_50] : memref<8x8x40xf32, #tpu.memory_space<vmem>>, vector<1x8x40xf32>
    %82 = vector.shape_cast %81 : vector<1x8x40xf32> to vector<8x40xf32>
    %cst_51 = arith.constant dense<0.000000e+00> : vector<8x216xf32>
    %83 = tpu.matmul %82, %1, %cst_51 {dimension_numbers = #tpu.dot_dimension_numbers<[1], [0], [0], [1], [0, 0, 1, 1], [], []>} : vector<8x40xf32>, vector<40x216xf32>, vector<8x216xf32> -> vector<8x216xf32>
    %cst_52 = arith.constant 0.000000e+00 : f32
    %84 = vector.broadcast %cst_52 : f32 to vector<8x216xf32>
    %85 = arith.cmpf oge, %83, %84 : vector<8x216xf32>
    %cst_53 = arith.constant 0.00999999977 : f32
    %86 = vector.broadcast %cst_53 : f32 to vector<8x216xf32>
    %87 = arith.mulf %86, %83 : vector<8x216xf32>
    %88 = arith.select %85, %83, %87 : vector<8x216xi1>, vector<8x216xf32>
    %c0_54 = arith.constant 0 : index
    %89 = arith.index_cast %c6_i32 : i32 to index
    %c0_55 = arith.constant 0 : index
    %c0_56 = arith.constant 0 : index
    %90 = vector.load %arg3[%c0_54, %89, %c0_55, %c0_56] : memref<1x8x8x216xf32, #tpu.memory_space<vmem>>, vector<1x1x8x216xf32>
    %91 = vector.shape_cast %90 : vector<1x1x8x216xf32> to vector<8x216xf32>
    %92 = vector.shape_cast %88 : vector<8x216xf32> to vector<1x1x8x216xf32>
    tpu.vector_store %arg3[%c0_54, %89, %c0_55, %c0_56], %92 {strides = array<i32>} : memref<1x8x8x216xf32, #tpu.memory_space<vmem>>, vector<1x1x8x216xf32>,
    %c7_i32 = arith.constant 7 : i32
    %93 = arith.index_cast %c7_i32 : i32 to index
    %c0_57 = arith.constant 0 : index
    %c0_58 = arith.constant 0 : index
    %94 = vector.load %arg2[%93, %c0_57, %c0_58] : memref<8x8x40xf32, #tpu.memory_space<vmem>>, vector<1x8x40xf32>
    %95 = vector.shape_cast %94 : vector<1x8x40xf32> to vector<8x40xf32>
    %cst_59 = arith.constant dense<0.000000e+00> : vector<8x216xf32>
    %96 = tpu.matmul %95, %1, %cst_59 {dimension_numbers = #tpu.dot_dimension_numbers<[1], [0], [0], [1], [0, 0, 1, 1], [], []>} : vector<8x40xf32>, vector<40x216xf32>, vector<8x216xf32> -> vector<8x216xf32>
    %cst_60 = arith.constant 0.000000e+00 : f32
    %97 = vector.broadcast %cst_60 : f32 to vector<8x216xf32>
    %98 = arith.cmpf oge, %96, %97 : vector<8x216xf32>
    %cst_61 = arith.constant 0.00999999977 : f32
    %99 = vector.broadcast %cst_61 : f32 to vector<8x216xf32>
    %100 = arith.mulf %99, %96 : vector<8x216xf32>
    %101 = arith.select %98, %96, %100 : vector<8x216xi1>, vector<8x216xf32>
    %c0_62 = arith.constant 0 : index
    %102 = arith.index_cast %c7_i32 : i32 to index
    %c0_63 = arith.constant 0 : index
    %c0_64 = arith.constant 0 : index
    %103 = vector.load %arg3[%c0_62, %102, %c0_63, %c0_64] : memref<1x8x8x216xf32, #tpu.memory_space<vmem>>, vector<1x1x8x216xf32>
    %104 = vector.shape_cast %103 : vector<1x1x8x216xf32> to vector<8x216xf32>
    %105 = vector.shape_cast %101 : vector<8x216xf32> to vector<1x1x8x216xf32>
    tpu.vector_store %arg3[%c0_62, %102, %c0_63, %c0_64], %105 {strides = array<i32>} : memref<1x8x8x216xf32, #tpu.memory_space<vmem>>, vector<1x1x8x216xf32>,
    %c8_i32 = arith.constant 8 : i32
    return
  }
  func.func @transform_0(%arg0: i32) -> (i32, i32, i32) {
    %c0_i32 = arith.constant 0 : i32
    %c0_i32_0 = arith.constant 0 : i32
    %c0_i32_1 = arith.constant 0 : i32
    return %arg0, %c0_i32, %c0_i32_0 : i32, i32, i32
  }
  func.func @transform_1(%arg0: i32) -> (i32, i32, i32) {
    %c0_i32 = arith.constant 0 : i32
    %c0_i32_0 = arith.constant 0 : i32
    %c0_i32_1 = arith.constant 0 : i32
    %c0_i32_2 = arith.constant 0 : i32
    return %c0_i32, %c0_i32_0, %c0_i32_1 : i32, i32, i32
  }
  func.func @transform_2(%arg0: i32) -> (i32, i32, i32, i32) {
    %c0_i32 = arith.constant 0 : i32
    %c0_i32_0 = arith.constant 0 : i32
    %c0_i32_1 = arith.constant 0 : i32
    %c0_i32_2 = arith.constant 0 : i32
    return %arg0, %c0_i32, %c0_i32_0, %c0_i32_1 : i32, i32, i32, i32
  }
}

</mosaic_0001>

<llo_original>
// kernel: upsample_forward.1
$region0: #{upsample_forward.1}
  #allocation0 [shape = 'u32[]', space=smem, size = 0x4, offset = 0x4, fixed_abs, tag = 'smem constant byte address 0x4 - core index']
  #allocation1 [shape = 'u32[72,128]{1,0:T(1,128)}', space=vmem, size = 0x9000, scoped, tag = 'internal scratch']
  %s0 = inlined_call_operand.vmem [shape: f32[2,40,216], index: 0, kind: input, shape index: {}]
  %s1 = inlined_call_operand.vmem [shape: f32[8,8,40], index: 1, kind: input, shape index: {}]
  %s2 = inlined_call_operand.vmem [shape: f32[2,8,8,216], index: 2, kind: output, shape index: {}]
  %s3 = sld [smem:[#allocation0]]
  $region41: #{upsample_forward.1} parent=0
    _
  %s5 = ssub.s32 1, %s3
  %s6 = scalar_select 0, %s5, %s3
  loop: start=0, step=1, limit=4
  $region2: #{upsample_forward.1} parent=0 // loop_pre_header
    _
  $region3: #{upsample_forward.1} parent=0 // loop_header
    %s8 = sphi 0, %s12
    %p9 = scmp.ge.s32.totalorder %s8, 4
    %s18 = sphi 0, %s20
    %s21 = sphi 0, %s18
    %s22 = sphi 0, %s21
    %s38 = sphi 0, %s22
    %s42 = sphi 0, %s42
    %s44 = sphi 0, %s42
    %s45 = sphi 0, %s44
    %s59 = sphi 0, %s45
    %s65 = sphi 0, %s67
    %s68 = sphi 0, %s65
    %s69 = sphi 0, %s68
    %s85 = sphi 0, %s69
  $region4: #{upsample_forward.1} parent=0 // loop_header_branch
    %11 = sbr.rel (%p9) target = $region8
  $region5: #{upsample_forward.1} parent=0 // loop_body
    %s13 = ssub.s32 %s8, 1
    %s14 = ssub.s32 %s8, 2
    %s15 = sadd.s32 %s8, 1
    %s16 = ssub.s32 %s8, %s15
    %p17 = scmp.eq.s32.totalorder %s16, 0
    %s19 = sadd.s32 %s18, 1
    %s20 = scalar_select %p17, %s18, %s19
    %p23 = pneg %p17
    %p24 = scmp.eq.s32.totalorder %s8, 1
    %p25 = por %p23, %p24
    %p26 = scmp.ne.s32.totalorder %s18, %s21
    %p27 = scmp.eq.s32.totalorder %s8, 0
    %p28 = por %p26, %p27
    %p29 = scmp.ne.s32.totalorder %s18, %s21
    %p30 = scmp.eq.s32.totalorder %s13, 1
    %p31 = por %p29, %p30
    %p32 = scmp.ne.s32.totalorder %s21, %s22
    %p33 = scmp.eq.s32.totalorder %s13, 0
    %p34 = por %p32, %p33
    %p35 = scmp.ne.s32.totalorder %s21, %s22
    %p36 = scmp.eq.s32.totalorder %s14, 1
    %p37 = por %p35, %p36
    %p39 = scmp.ne.s32.totalorder %s22, %s38
    %p40 = scmp.eq.s32.totalorder %s14, 0
    %p41 = por %p39, %p40
    %s43 = sadd.s32 %s42, 1
    %p46 = scmp.eq.s32.totalorder %s8, 1
    %p47 = scmp.ne.s32.totalorder %s42, %s44
    %p48 = scmp.eq.s32.totalorder %s8, 0
    %p49 = por %p47, %p48
    %p50 = scmp.ne.s32.totalorder %s42, %s44
    %p51 = scmp.eq.s32.totalorder %s13, 1
    %p52 = por %p50, %p51
    %p53 = scmp.ne.s32.totalorder %s44, %s45
    %p54 = scmp.eq.s32.totalorder %s13, 0
    %p55 = por %p53, %p54
    %p56 = scmp.ne.s32.totalorder %s44, %s45
    %p57 = scmp.eq.s32.totalorder %s14, 1
    %p58 = por %p56, %p57
    %p60 = scmp.ne.s32.totalorder %s45, %s59
    %p61 = scmp.eq.s32.totalorder %s14, 0
    %p62 = por %p60, %p61
    %s63 = ssub.s32 %s8, %s15
    %p64 = scmp.eq.s32.totalorder %s63, 0
    %s66 = sadd.s32 %s65, 1
    %s67 = scalar_select %p64, %s65, %s66
    %p70 = pneg %p64
    %p71 = scmp.eq.s32.totalorder %s8, 1
    %p72 = por %p70, %p71
    %p73 = scmp.ne.s32.totalorder %s65, %s68
    %p74 = scmp.eq.s32.totalorder %s8, 0
    %p75 = por %p73, %p74
    %p76 = scmp.ne.s32.totalorder %s65, %s68
    %p77 = scmp.eq.s32.totalorder %s13, 1
    %p78 = por %p76, %p77
    %p79 = scmp.ne.s32.totalorder %s68, %s69
    %p80 = scmp.eq.s32.totalorder %s13, 0
    %p81 = por %p79, %p80
    %p82 = scmp.ne.s32.totalorder %s68, %s69
    %p83 = scmp.eq.s32.totalorder %s14, 1
    %p84 = por %p82, %p83
    %p86 = scmp.ne.s32.totalorder %s69, %s85
    %p87 = scmp.eq.s32.totalorder %s14, 0
    %p88 = por %p86, %p87
    %p89 = scmp.le.s32.totalorder 1, %s8
    %p90 = scmp.lt.s32.totalorder %s8, 3
    %p91 = pnand %p89, %p90
    %p92 = pneg %p91
    // Predicated region
    $region9: #{upsample_forward.1} parent=5 // pred_check
      _
    $region10: #{upsample_forward.1} parent=5 // pred_check_branch
      %94 = sbr.rel (%p91) target = $region12
    $region11: #{upsample_forward.1} parent=5 // pred_region
      %s95 = ssub.s32 %s8, 1
      // Predicated region
      $region13: #{upsample_forward.1} parent=11 // pred_check
        %p96 = pneg %p55
      $region14: #{upsample_forward.1} parent=11 // pred_check_branch
        %98 = sbr.rel (%p96) target = $region16
      $region15: #{upsample_forward.1} parent=11 // pred_region
        _
      $region16: #{upsample_forward.1} parent=11 // pred_fallthru
        _
    $region12: #{upsample_forward.1} parent=5 // pred_fallthru
      _
    %p99 = scmp.lt.s32.totalorder %s8, 2
    // Predicated region
    $region17: #{upsample_forward.1} parent=5 // pred_check
      %p100 = pneg %p99
    $region18: #{upsample_forward.1} parent=5 // pred_check_branch
      %102 = sbr.rel (%p100) target = $region20
    $region19: #{upsample_forward.1} parent=5 // pred_region
      // Predicated region
      $region21: #{upsample_forward.1} parent=19 // pred_check
        %p103 = pneg %p28
      $region22: #{upsample_forward.1} parent=19 // pred_check_branch
        %105 = sbr.rel (%p103) target = $region24
      $region23: #{upsample_forward.1} parent=19 // pred_region
        %p106 = scmp.lt.s32.totalorder %s8, 1
        %s107 = scalar_select %p106, %s8, 1
        %s108 = smul.addr %s107, 10
        %s109 = smul.addr %s108, 8
        %s110 = scalar_lea.vmem %s0, %s109
      $region24: #{upsample_forward.1} parent=19 // pred_fallthru
        _
    $region20: #{upsample_forward.1} parent=5 // pred_fallthru
      _
    %p111 = scmp.le.s32.totalorder 1, %s8
    %p112 = scmp.lt.s32.totalorder %s8, 3
    %p113 = pnand %p111, %p112
    %p114 = pneg %p113
    // Predicated region
    $region25: #{upsample_forward.1} parent=5 // pred_check
      _
    $region26: #{upsample_forward.1} parent=5 // pred_check_branch
      %116 = sbr.rel (%p113) target = $region28
    $region27: #{upsample_forward.1} parent=5 // pred_region
      %s117 = ssub.s32 %s8, 1
      %p118 = scmp.lt.s32.totalorder %s13, 1
      %s119 = scalar_select %p118, %s13, 1
      %s120 = smul.addr %s119, 10
      %s121 = smul.addr %s120, 8
      %s122 = scalar_lea.vmem %s0, %s121
      %p123 = pneg %p34
      %p124 = pneg %p31
      %p125 = pneg %p55
      %p126 = pneg %p52
      %p127 = pneg %p81
      %p128 = pneg %p78
      %p129 = scmp.lt.s32.totalorder %s13, 1
      %s130 = scalar_select %p129, %s13, 1
      %s131 = smul.addr %s130, 16
      %s132 = smul.addr %s131, 8
      %s133 = scalar_lea.vmem %s2, %s132
      %p134 = scmp.lt.s32.totalorder %s13, 1
      %s135 = scalar_select %p134, %s13, 1
      %s136 = smul.addr %s135, 10
      %s137 = smul.addr %s136, 8
      %s138 = scalar_lea.vmem %s0, %s137
      %p139 = scmp.lt.s32.totalorder %s13, 1
      %s140 = scalar_select %p139, %s13, 1
      %s141 = smul.addr %s140, 16
      %s142 = smul.addr %s141, 8
      %s143 = scalar_lea.vmem %s2, %s142
      %v144 = vld [vmem:[%s138] sm:$0xff]
      %v145 = vld [vmem:[%s138 + $0x8] sm:$0xff]
      %v146 = vld [vmem:[%s138 + $0x10] sm:$0xff]
      %v147 = vld [vmem:[%s138 + $0x18] sm:$0xff]
      %v148 = vld [vmem:[%s138 + $0x20] sm:$0xff]
      %v149 = vld [vmem:[%s138 + $0x28] sm:$0xff]
      %v150 = vld [vmem:[%s138 + $0x30] sm:$0xff]
      %v151 = vld [vmem:[%s138 + $0x38] sm:$0xff]
      %v152 = vld [vmem:[%s138 + $0x40] sm:$0xff]
      %v153 = vld [vmem:[%s138 + $0x48] sm:$0xff]
      %v154 = vld [vmem:[%s1] sm:$0xff]
      %vm155 = vcmask 326656
      %v157 = vsel %vm155, %v154, 0
      %159 = vmatpush.msra.mxu0 0.0
      %160 = vmatpush.msra.mxu0 0.0
      %161 = vmatpush.msra.mxu0 0.0
      %162 = vmatpush.msra.mxu0 0.0
      %163 = vmatpush.msra.mxu0 0.0
      %164 = vmatpush.msra.mxu0 0.0
      %165 = vmatpush.msra.mxu0 0.0
      %166 = vmatpush.msra.mxu0 0.0
      %167 = vmatpush.msra.mxu0 0.0
      %168 = vmatpush.msra.mxu0 0.0
      %169 = vmatpush.msra.mxu0 0.0
      %170 = vmatpush.msra.mxu0 %v152
      %171 = vmatpush.msra.mxu0 %v150
      %172 = vmatpush.msra.mxu0 %v148
      %173 = vmatpush.msra.mxu0 %v146
      %174 = vmatpush.msra.mxu0 %v144
      %175 = vmatmul.f32.gmra.mxu0 %v157
      %v176 = vpop.f32.mrf.mxu0
      %v177 = vadd.f32 0.0, %v176
      %178 = vdwg.mxu0
      %179 = vmatpush.msra.mxu0 0.0
      %180 = vmatpush.msra.mxu0 0.0
      %181 = vmatpush.msra.mxu0 0.0
      %182 = vmatpush.msra.mxu0 0.0
      %183 = vmatpush.msra.mxu0 0.0
      %184 = vmatpush.msra.mxu0 0.0
      %185 = vmatpush.msra.mxu0 0.0
      %186 = vmatpush.msra.mxu0 0.0
      %187 = vmatpush.msra.mxu0 0.0
      %188 = vmatpush.msra.mxu0 0.0
      %189 = vmatpush.msra.mxu0 0.0
      %190 = vmatpush.msra.mxu0 %v153
      %191 = vmatpush.msra.mxu0 %v151
      %192 = vmatpush.msra.mxu0 %v149
      %193 = vmatpush.msra.mxu0 %v147
      %194 = vmatpush.msra.mxu0 %v145
      %195 = vmatmul.f32.gmra.mxu0 %v157
      %v196 = vpop.f32.mrf.mxu0
      %v197 = vadd.f32 0.0, %v196
      %198 = vdwg.mxu0
      %vm199 = vcmp.ge.f32.partialorder %v177, 0.0
      %vm200 = vcmp.ge.f32.partialorder %v197, 0.0
      %v201 = vmul.f32 %v177, 0.01
      %v202 = vmul.f32 %v197, 0.01
      %v203 = vsel %vm199, %v177, %v201
      %v204 = vsel %vm200, %v197, %v202
      %205 = vst [vmem:[%s143] sm:$0xff] %v203
      %vm206 = vcmask 719872
      %207 = vst.msk [vmem:[%s143 + $0x8] sm:$0xff] %vm206, %v204
      %s208 = scalar_lea.vmem %s1, 8
      %v209 = vld [vmem:[%s208] sm:$0xff]
      %v211 = vsel %vm155, %v209, 0
      %213 = vmatpush.msra.mxu0 0.0
      %214 = vmatpush.msra.mxu0 0.0
      %215 = vmatpush.msra.mxu0 0.0
      %216 = vmatpush.msra.mxu0 0.0
      %217 = vmatpush.msra.mxu0 0.0
      %218 = vmatpush.msra.mxu0 0.0
      %219 = vmatpush.msra.mxu0 0.0
      %220 = vmatpush.msra.mxu0 0.0
      %221 = vmatpush.msra.mxu0 0.0
      %222 = vmatpush.msra.mxu0 0.0
      %223 = vmatpush.msra.mxu0 0.0
      %224 = vmatpush.msra.mxu0 %v152
      %225 = vmatpush.msra.mxu0 %v150
      %226 = vmatpush.msra.mxu0 %v148
      %227 = vmatpush.msra.mxu0 %v146
      %228 = vmatpush.msra.mxu0 %v144
      %229 = vmatmul.f32.gmra.mxu0 %v211
      %v230 = vpop.f32.mrf.mxu0
      %v231 = vadd.f32 0.0, %v230
      %232 = vdwg.mxu0
      %233 = vmatpush.msra.mxu0 0.0
      %234 = vmatpush.msra.mxu0 0.0
      %235 = vmatpush.msra.mxu0 0.0
      %236 = vmatpush.msra.mxu0 0.0
      %237 = vmatpush.msra.mxu0 0.0
      %238 = vmatpush.msra.mxu0 0.0
      %239 = vmatpush.msra.mxu0 0.0
      %240 = vmatpush.msra.mxu0 0.0
      %241 = vmatpush.msra.mxu0 0.0
      %242 = vmatpush.msra.mxu0 0.0
      %243 = vmatpush.msra.mxu0 0.0
      %244 = vmatpush.msra.mxu0 %v153
      %245 = vmatpush.msra.mxu0 %v151
      %246 = vmatpush.msra.mxu0 %v149
      %247 = vmatpush.msra.mxu0 %v147
      %248 = vmatpush.msra.mxu0 %v145
      %249 = vmatmul.f32.gmra.mxu0 %v211
      %v250 = vpop.f32.mrf.mxu0
      %v251 = vadd.f32 0.0, %v250
      %252 = vdwg.mxu0
      %vm253 = vcmp.ge.f32.partialorder %v231, 0.0
      %vm254 = vcmp.ge.f32.partialorder %v251, 0.0
      %v255 = vmul.f32 %v231, 0.01
      %v256 = vmul.f32 %v251, 0.01
      %v257 = vsel %vm253, %v231, %v255
      %v258 = vsel %vm254, %v251, %v256
      %s259 = scalar_lea.vmem %s143, 16
      %260 = vst [vmem:[%s259] sm:$0xff] %v257
      %261 = vst.msk [vmem:[%s259 + $0x8] sm:$0xff] %vm206, %v258
      %s262 = scalar_lea.vmem %s1, 16
      %v263 = vld [vmem:[%s262] sm:$0xff]
      %v265 = vsel %vm155, %v263, 0
      %267 = vmatpush.msra.mxu0 0.0
      %268 = vmatpush.msra.mxu0 0.0
      %269 = vmatpush.msra.mxu0 0.0
      %270 = vmatpush.msra.mxu0 0.0
      %271 = vmatpush.msra.mxu0 0.0
      %272 = vmatpush.msra.mxu0 0.0
      %273 = vmatpush.msra.mxu0 0.0
      %274 = vmatpush.msra.mxu0 0.0
      %275 = vmatpush.msra.mxu0 0.0
      %276 = vmatpush.msra.mxu0 0.0
      %277 = vmatpush.msra.mxu0 0.0
      %278 = vmatpush.msra.mxu0 %v152
      %279 = vmatpush.msra.mxu0 %v150
      %280 = vmatpush.msra.mxu0 %v148
      %281 = vmatpush.msra.mxu0 %v146
      %282 = vmatpush.msra.mxu0 %v144
      %283 = vmatmul.f32.gmra.mxu0 %v265
      %v284 = vpop.f32.mrf.mxu0
      %v285 = vadd.f32 0.0, %v284
      %286 = vdwg.mxu0
      %287 = vmatpush.msra.mxu0 0.0
      %288 = vmatpush.msra.mxu0 0.0
      %289 = vmatpush.msra.mxu0 0.0
      %290 = vmatpush.msra.mxu0 0.0
      %291 = vmatpush.msra.mxu0 0.0
      %292 = vmatpush.msra.mxu0 0.0
      %293 = vmatpush.msra.mxu0 0.0
      %294 = vmatpush.msra.mxu0 0.0
      %295 = vmatpush.msra.mxu0 0.0
      %296 = vmatpush.msra.mxu0 0.0
      %297 = vmatpush.msra.mxu0 0.0
      %298 = vmatpush.msra.mxu0 %v153
      %299 = vmatpush.msra.mxu0 %v151
      %300 = vmatpush.msra.mxu0 %v149
      %301 = vmatpush.msra.mxu0 %v147
      %302 = vmatpush.msra.mxu0 %v145
      %303 = vmatmul.f32.gmra.mxu0 %v265
      %v304 = vpop.f32.mrf.mxu0
      %v305 = vadd.f32 0.0, %v304
      %306 = vdwg.mxu0
      %vm307 = vcmp.ge.f32.partialorder %v285, 0.0
      %vm308 = vcmp.ge.f32.partialorder %v305, 0.0
      %v309 = vmul.f32 %v285, 0.01
      %v310 = vmul.f32 %v305, 0.01
      %v311 = vsel %vm307, %v285, %v309
      %v312 = vsel %vm308, %v305, %v310
      %s313 = scalar_lea.vmem %s143, 32
      %314 = vst [vmem:[%s313] sm:$0xff] %v311
      %315 = vst.msk [vmem:[%s313 + $0x8] sm:$0xff] %vm206, %v312
      %s316 = scalar_lea.vmem %s1, 24
      %v317 = vld [vmem:[%s316] sm:$0xff]
      %v319 = vsel %vm155, %v317, 0
      %321 = vmatpush.msra.mxu0 0.0
      %322 = vmatpush.msra.mxu0 0.0
      %323 = vmatpush.msra.mxu0 0.0
      %324 = vmatpush.msra.mxu0 0.0
      %325 = vmatpush.msra.mxu0 0.0
      %326 = vmatpush.msra.mxu0 0.0
      %327 = vmatpush.msra.mxu0 0.0
      %328 = vmatpush.msra.mxu0 0.0
      %329 = vmatpush.msra.mxu0 0.0
      %330 = vmatpush.msra.mxu0 0.0
      %331 = vmatpush.msra.mxu0 0.0
      %332 = vmatpush.msra.mxu0 %v152
      %333 = vmatpush.msra.mxu0 %v150
      %334 = vmatpush.msra.mxu0 %v148
      %335 = vmatpush.msra.mxu0 %v146
      %336 = vmatpush.msra.mxu0 %v144
      %337 = vmatmul.f32.gmra.mxu0 %v319
      %v338 = vpop.f32.mrf.mxu0
      %v339 = vadd.f32 0.0, %v338
      %340 = vdwg.mxu0
      %341 = vmatpush.msra.mxu0 0.0
      %342 = vmatpush.msra.mxu0 0.0
      %343 = vmatpush.msra.mxu0 0.0
      %344 = vmatpush.msra.mxu0 0.0
      %345 = vmatpush.msra.mxu0 0.0
      %346 = vmatpush.msra.mxu0 0.0
      %347 = vmatpush.msra.mxu0 0.0
      %348 = vmatpush.msra.mxu0 0.0
      %349 = vmatpush.msra.mxu0 0.0
      %350 = vmatpush.msra.mxu0 0.0
      %351 = vmatpush.msra.mxu0 0.0
      %352 = vmatpush.msra.mxu0 %v153
      %353 = vmatpush.msra.mxu0 %v151
      %354 = vmatpush.msra.mxu0 %v149
      %355 = vmatpush.msra.mxu0 %v147
      %356 = vmatpush.msra.mxu0 %v145
      %357 = vmatmul.f32.gmra.mxu0 %v319
      %v358 = vpop.f32.mrf.mxu0
      %v359 = vadd.f32 0.0, %v358
      %360 = vdwg.mxu0
      %vm361 = vcmp.ge.f32.partialorder %v339, 0.0
      %vm362 = vcmp.ge.f32.partialorder %v359, 0.0
      %v363 = vmul.f32 %v339, 0.01
      %v364 = vmul.f32 %v359, 0.01
      %v365 = vsel %vm361, %v339, %v363
      %v366 = vsel %vm362, %v359, %v364
      %s367 = scalar_lea.vmem %s143, 48
      %368 = vst [vmem:[%s367] sm:$0xff] %v365
      %369 = vst.msk [vmem:[%s367 + $0x8] sm:$0xff] %vm206, %v366
      %s370 = scalar_lea.vmem %s1, 32
      %v371 = vld [vmem:[%s370] sm:$0xff]
      %v373 = vsel %vm155, %v371, 0
      %375 = vmatpush.msra.mxu0 0.0
      %376 = vmatpush.msra.mxu0 0.0
      %377 = vmatpush.msra.mxu0 0.0
      %378 = vmatpush.msra.mxu0 0.0
      %379 = vmatpush.msra.mxu0 0.0
      %380 = vmatpush.msra.mxu0 0.0
      %381 = vmatpush.msra.mxu0 0.0
      %382 = vmatpush.msra.mxu0 0.0
      %383 = vmatpush.msra.mxu0 0.0
      %384 = vmatpush.msra.mxu0 0.0
      %385 = vmatpush.msra.mxu0 0.0
      %386 = vmatpush.msra.mxu0 %v152
      %387 = vmatpush.msra.mxu0 %v150
      %388 = vmatpush.msra.mxu0 %v148
      %389 = vmatpush.msra.mxu0 %v146
      %390 = vmatpush.msra.mxu0 %v144
      %391 = vmatmul.f32.gmra.mxu0 %v373
      %v392 = vpop.f32.mrf.mxu0
      %v393 = vadd.f32 0.0, %v392
      %394 = vdwg.mxu0
      %395 = vmatpush.msra.mxu0 0.0
      %396 = vmatpush.msra.mxu0 0.0
      %397 = vmatpush.msra.mxu0 0.0
      %398 = vmatpush.msra.mxu0 0.0
      %399 = vmatpush.msra.mxu0 0.0
      %400 = vmatpush.msra.mxu0 0.0
      %401 = vmatpush.msra.mxu0 0.0
      %402 = vmatpush.msra.mxu0 0.0
      %403 = vmatpush.msra.mxu0 0.0
      %404 = vmatpush.msra.mxu0 0.0
      %405 = vmatpush.msra.mxu0 0.0
      %406 = vmatpush.msra.mxu0 %v153
      %407 = vmatpush.msra.mxu0 %v151
      %408 = vmatpush.msra.mxu0 %v149
      %409 = vmatpush.msra.mxu0 %v147
      %410 = vmatpush.msra.mxu0 %v145
      %411 = vmatmul.f32.gmra.mxu0 %v373
      %v412 = vpop.f32.mrf.mxu0
      %v413 = vadd.f32 0.0, %v412
      %414 = vdwg.mxu0
      %vm415 = vcmp.ge.f32.partialorder %v393, 0.0
      %vm416 = vcmp.ge.f32.partialorder %v413, 0.0
      %v417 = vmul.f32 %v393, 0.01
      %v418 = vmul.f32 %v413, 0.01
      %v419 = vsel %vm415, %v393, %v417
      %v420 = vsel %vm416, %v413, %v418
      %s421 = scalar_lea.vmem %s143, 64
      %422 = vst [vmem:[%s421] sm:$0xff] %v419
      %423 = vst.msk [vmem:[%s421 + $0x8] sm:$0xff] %vm206, %v420
      %s424 = scalar_lea.vmem %s1, 40
      %v425 = vld [vmem:[%s424] sm:$0xff]
      %v427 = vsel %vm155, %v425, 0
      %429 = vmatpush.msra.mxu0 0.0
      %430 = vmatpush.msra.mxu0 0.0
      %431 = vmatpush.msra.mxu0 0.0
      %432 = vmatpush.msra.mxu0 0.0
      %433 = vmatpush.msra.mxu0 0.0
      %434 = vmatpush.msra.mxu0 0.0
      %435 = vmatpush.msra.mxu0 0.0
      %436 = vmatpush.msra.mxu0 0.0
      %437 = vmatpush.msra.mxu0 0.0
      %438 = vmatpush.msra.mxu0 0.0
      %439 = vmatpush.msra.mxu0 0.0
      %440 = vmatpush.msra.mxu0 %v152
      %441 = vmatpush.msra.mxu0 %v150
      %442 = vmatpush.msra.mxu0 %v148
      %443 = vmatpush.msra.mxu0 %v146
      %444 = vmatpush.msra.mxu0 %v144
      %445 = vmatmul.f32.gmra.mxu0 %v427
      %v446 = vpop.f32.mrf.mxu0
      %v447 = vadd.f32 0.0, %v446
      %448 = vdwg.mxu0
      %449 = vmatpush.msra.mxu0 0.0
      %450 = vmatpush.msra.mxu0 0.0
      %451 = vmatpush.msra.mxu0 0.0
      %452 = vmatpush.msra.mxu0 0.0
      %453 = vmatpush.msra.mxu0 0.0
      %454 = vmatpush.msra.mxu0 0.0
      %455 = vmatpush.msra.mxu0 0.0
      %456 = vmatpush.msra.mxu0 0.0
      %457 = vmatpush.msra.mxu0 0.0
      %458 = vmatpush.msra.mxu0 0.0
      %459 = vmatpush.msra.mxu0 0.0
      %460 = vmatpush.msra.mxu0 %v153
      %461 = vmatpush.msra.mxu0 %v151
      %462 = vmatpush.msra.mxu0 %v149
      %463 = vmatpush.msra.mxu0 %v147
      %464 = vmatpush.msra.mxu0 %v145
      %465 = vmatmul.f32.gmra.mxu0 %v427
      %v466 = vpop.f32.mrf.mxu0
      %v467 = vadd.f32 0.0, %v466
      %468 = vdwg.mxu0
      %vm469 = vcmp.ge.f32.partialorder %v447, 0.0
      %vm470 = vcmp.ge.f32.partialorder %v467, 0.0
      %v471 = vmul.f32 %v447, 0.01
      %v472 = vmul.f32 %v467, 0.01
      %v473 = vsel %vm469, %v447, %v471
      %v474 = vsel %vm470, %v467, %v472
      %s475 = scalar_lea.vmem %s143, 80
      %476 = vst [vmem:[%s475] sm:$0xff] %v473
      %477 = vst.msk [vmem:[%s475 + $0x8] sm:$0xff] %vm206, %v474
      %s478 = scalar_lea.vmem %s1, 48
      %v479 = vld [vmem:[%s478] sm:$0xff]
      %v481 = vsel %vm155, %v479, 0
      %483 = vmatpush.msra.mxu0 0.0
      %484 = vmatpush.msra.mxu0 0.0
      %485 = vmatpush.msra.mxu0 0.0
      %486 = vmatpush.msra.mxu0 0.0
      %487 = vmatpush.msra.mxu0 0.0
      %488 = vmatpush.msra.mxu0 0.0
      %489 = vmatpush.msra.mxu0 0.0
      %490 = vmatpush.msra.mxu0 0.0
      %491 = vmatpush.msra.mxu0 0.0
      %492 = vmatpush.msra.mxu0 0.0
      %493 = vmatpush.msra.mxu0 0.0
      %494 = vmatpush.msra.mxu0 %v152
      %495 = vmatpush.msra.mxu0 %v150
      %496 = vmatpush.msra.mxu0 %v148
      %497 = vmatpush.msra.mxu0 %v146
      %498 = vmatpush.msra.mxu0 %v144
      %499 = vmatmul.f32.gmra.mxu0 %v481
      %v500 = vpop.f32.mrf.mxu0
      %v501 = vadd.f32 0.0, %v500
      %502 = vdwg.mxu0
      %503 = vmatpush.msra.mxu0 0.0
      %504 = vmatpush.msra.mxu0 0.0
      %505 = vmatpush.msra.mxu0 0.0
      %506 = vmatpush.msra.mxu0 0.0
      %507 = vmatpush.msra.mxu0 0.0
      %508 = vmatpush.msra.mxu0 0.0
      %509 = vmatpush.msra.mxu0 0.0
      %510 = vmatpush.msra.mxu0 0.0
      %511 = vmatpush.msra.mxu0 0.0
      %512 = vmatpush.msra.mxu0 0.0
      %513 = vmatpush.msra.mxu0 0.0
      %514 = vmatpush.msra.mxu0 %v153
      %515 = vmatpush.msra.mxu0 %v151
      %516 = vmatpush.msra.mxu0 %v149
      %517 = vmatpush.msra.mxu0 %v147
      %518 = vmatpush.msra.mxu0 %v145
      %519 = vmatmul.f32.gmra.mxu0 %v481
      %v520 = vpop.f32.mrf.mxu0
      %v521 = vadd.f32 0.0, %v520
      %522 = vdwg.mxu0
      %vm523 = vcmp.ge.f32.partialorder %v501, 0.0
      %vm524 = vcmp.ge.f32.partialorder %v521, 0.0
      %v525 = vmul.f32 %v501, 0.01
      %v526 = vmul.f32 %v521, 0.01
      %v527 = vsel %vm523, %v501, %v525
      %v528 = vsel %vm524, %v521, %v526
      %s529 = scalar_lea.vmem %s143, 96
      %530 = vst [vmem:[%s529] sm:$0xff] %v527
      %531 = vst.msk [vmem:[%s529 + $0x8] sm:$0xff] %vm206, %v528
      %s532 = scalar_lea.vmem %s1, 56
      %v533 = vld [vmem:[%s532] sm:$0xff]
      %v535 = vsel %vm155, %v533, 0
      %537 = vmatpush.msra.mxu0 0.0
      %538 = vmatpush.msra.mxu0 0.0
      %539 = vmatpush.msra.mxu0 0.0
      %540 = vmatpush.msra.mxu0 0.0
      %541 = vmatpush.msra.mxu0 0.0
      %542 = vmatpush.msra.mxu0 0.0
      %543 = vmatpush.msra.mxu0 0.0
      %544 = vmatpush.msra.mxu0 0.0
      %545 = vmatpush.msra.mxu0 0.0
      %546 = vmatpush.msra.mxu0 0.0
      %547 = vmatpush.msra.mxu0 0.0
      %548 = vmatpush.msra.mxu0 %v152
      %549 = vmatpush.msra.mxu0 %v150
      %550 = vmatpush.msra.mxu0 %v148
      %551 = vmatpush.msra.mxu0 %v146
      %552 = vmatpush.msra.mxu0 %v144
      %553 = vmatmul.f32.gmra.mxu0 %v535
      %v554 = vpop.f32.mrf.mxu0
      %v555 = vadd.f32 0.0, %v554
      %556 = vdwg.mxu0
      %557 = vmatpush.msra.mxu0 0.0
      %558 = vmatpush.msra.mxu0 0.0
      %559 = vmatpush.msra.mxu0 0.0
      %560 = vmatpush.msra.mxu0 0.0
      %561 = vmatpush.msra.mxu0 0.0
      %562 = vmatpush.msra.mxu0 0.0
      %563 = vmatpush.msra.mxu0 0.0
      %564 = vmatpush.msra.mxu0 0.0
      %565 = vmatpush.msra.mxu0 0.0
      %566 = vmatpush.msra.mxu0 0.0
      %567 = vmatpush.msra.mxu0 0.0
      %568 = vmatpush.msra.mxu0 %v153
      %569 = vmatpush.msra.mxu0 %v151
      %570 = vmatpush.msra.mxu0 %v149
      %571 = vmatpush.msra.mxu0 %v147
      %572 = vmatpush.msra.mxu0 %v145
      %573 = vmatmul.f32.gmra.mxu0 %v535
      %v574 = vpop.f32.mrf.mxu0
      %v575 = vadd.f32 0.0, %v574
      %576 = vdwg.mxu0
      %vm577 = vcmp.ge.f32.partialorder %v555, 0.0
      %vm578 = vcmp.ge.f32.partialorder %v575, 0.0
      %v579 = vmul.f32 %v555, 0.01
      %v580 = vmul.f32 %v575, 0.01
      %v581 = vsel %vm577, %v555, %v579
      %v582 = vsel %vm578, %v575, %v580
      %s583 = scalar_lea.vmem %s143, 112
      %584 = vst [vmem:[%s583] sm:$0xff] %v581
      %585 = vst.msk [vmem:[%s583 + $0x8] sm:$0xff] %vm206, %v582
      %p586 = scmp.lt.s32.totalorder %s13, 1
      %s587 = scalar_select %p586, %s13, 1
      %s588 = smul.addr %s587, 16
      %s589 = smul.addr %s588, 8
      %s590 = scalar_lea.vmem %s2, %s589
      // Predicated region
      $region29: #{upsample_forward.1} parent=27 // pred_check
        %p591 = pneg %p78
      $region30: #{upsample_forward.1} parent=27 // pred_check_branch
        %593 = sbr.rel (%p591) target = $region32
      $region31: #{upsample_forward.1} parent=27 // pred_region
        _
      $region32: #{upsample_forward.1} parent=27 // pred_fallthru
        _
    $region28: #{upsample_forward.1} parent=5 // pred_fallthru
      _
    %p594 = scmp.le.s32.totalorder 2, %s8
    // Predicated region
    $region33: #{upsample_forward.1} parent=5 // pred_check
      %p595 = pneg %p594
    $region34: #{upsample_forward.1} parent=5 // pred_check_branch
      %597 = sbr.rel (%p595) target = $region36
    $region35: #{upsample_forward.1} parent=5 // pred_region
      %s598 = ssub.s32 %s8, 2
      // Predicated region
      $region37: #{upsample_forward.1} parent=35 // pred_check
        %p599 = pneg %p84
      $region38: #{upsample_forward.1} parent=35 // pred_check_branch
        %601 = sbr.rel (%p599) target = $region40
      $region39: #{upsample_forward.1} parent=35 // pred_region
        %p602 = scmp.lt.s32.totalorder %s14, 1
        %s603 = scalar_select %p602, %s14, 1
        %s604 = smul.addr %s603, 16
        %s605 = smul.addr %s604, 8
        %s606 = scalar_lea.vmem %s2, %s605
      $region40: #{upsample_forward.1} parent=35 // pred_fallthru
        _
    $region36: #{upsample_forward.1} parent=5 // pred_fallthru
      _
  $region6: #{upsample_forward.1} parent=0 // loop_footer
    %s12 = sadd.s32 1, %s8
  $region7: #{upsample_forward.1} parent=0 // loop_footer_branch
    %7 = sbr.rel target = $region3
  $region8: #{upsample_forward.1} parent=0 // loop_exit
    _

</llo_original>
